<compile_context>
chip_gen: v5e
topology: v5e:2x2
jax: 0.10.0
libtpu: 0.0.40
codegen_flags: <defaults>
</compile_context>

<pallas_src>
import jax
import jax.numpy as jnp
from jax import lax
from jax.experimental import pallas as pl
from jax.experimental.pallas import tpu as pltpu

BN_EPS = 1e-5


def largegcn_kernel(x1_ref, g_ref, wa_ref, wb_ref, gamma_ref, beta_ref, out_ref):
    """Fused: graph mixing + two 1x1 projections + BatchNorm(affine) + ReLU."""
    n, c_out, tj = out_ref.shape

    x1f = x1_ref[...]                      # (N*Cin, TJ)  f32, lanes = TJ
    g = g_ref[...]                         # (TJ, TJ)     untransposed

    # Graph mixing: y[nc, t] = sum_s x1[nc, s] * g[t, s].
    # Contract on g's SECOND axis in-kernel (rhs-transposed dot, q@k^T style)
    # so the wrapper never materializes g^T in HBM.
    yf = lax.dot_general(
        x1f, g,
        dimension_numbers=(((1,), (1,)), ((), ())),
        preferred_element_type=jnp.float32)                        # (N*Cin, TJ)

    # Fused 1x1 convs: z[n] = W @ y[n] + W1 @ x1[n], expressed with
    # block-diagonal Wa/Wb built once in the wrapper.  Two K=N*Cin MXU passes
    # + a VPU add; no in-kernel concatenate / VMEM relayout.
    zf = (jnp.dot(wa_ref[...], yf, preferred_element_type=jnp.float32)
          + jnp.dot(wb_ref[...], x1f, preferred_element_type=jnp.float32))

    # (N*Cout, TJ) -> (N, Cout, TJ): sublane-dim split at a multiple of 8, so
    # this is a layout-preserving view (no VMEM relayout).
    z = zf.reshape(n, c_out, tj)

    # BatchNorm2d, training-mode batch statistics (biased variance),
    # two-pass for numerical stability: mean first, then E[(z-mean)^2].
    inv_count = 1.0 / (n * tj)
    mean = jnp.sum(jnp.sum(z, axis=2, keepdims=True),
                   axis=0, keepdims=True) * inv_count              # (1, Cout, 1)
    zc = z - mean
    var = jnp.sum(jnp.sum(zc * zc, axis=2, keepdims=True),
                  axis=0, keepdims=True) * inv_count               # (1, Cout, 1)

    scale = gamma_ref[...] * lax.rsqrt(var + BN_EPS)               # rsqrt -> EUP
    out_ref[...] = jnp.maximum(zc * scale + beta_ref[...], 0.0)    # (N, Cout, TJ)


def make_largegcn_params(w, w1, n):
    """Parameter-style precompute (NOT in the hot path): block-diagonal weights
    so the per-sample 1x1 convs become single matmuls over the flattened batch."""
    eye = jnp.eye(n, dtype=w.dtype)
    wa = jnp.kron(eye, w)      # (N*Cout, N*Cin) applies W  per-sample
    wb = jnp.kron(eye, w1)     # (N*Cout, N*Cin) applies W1 per-sample
    return wa, wb


def _largegcn_forward_impl(x1_nchw, g, wa, wb, gamma, beta):
    """x1_nchw: (N, Cin, TJ, 1), g: (TJ, TJ), wa/wb: (N*Cout, N*Cin)
       -> (N, Cout, TJ, 1)."""
    n, c_in, tj, _ = x1_nchw.shape
    c_out = gamma.shape[0]

    # Free, layout-preserving reshape: NCHW (N,Cin,TJ,1) -> (N*Cin, TJ).
    x1f = x1_nchw.reshape(n * c_in, tj)

    # Advisory cost so XLA's scheduler can overlap this tiny custom call.
    flops = (2 * (n * c_in) * tj * tj          # graph mixing
             + 4 * (n * c_out) * (n * c_in) * tj   # two projections
             + 10 * n * c_out * tj)            # BN + ReLU elementwise
    bytes_accessed = 4 * (x1f.size + g.size + wa.size + wb.size
                          + 2 * c_out + n * c_out * tj)

    out = pl.pallas_call(
        largegcn_kernel,
        out_shape=jax.ShapeDtypeStruct((n, c_out, tj), jnp.float32),
        grid=(1,),
        in_specs=[
            pl.BlockSpec((n * c_in, tj), lambda i: (0, 0)),
            pl.BlockSpec((tj, tj), lambda i: (0, 0)),
            pl.BlockSpec((n * c_out, n * c_in), lambda i: (0, 0)),
            pl.BlockSpec((n * c_out, n * c_in), lambda i: (0, 0)),
            pl.BlockSpec((c_out, 1), lambda i: (0, 0)),
            pl.BlockSpec((c_out, 1), lambda i: (0, 0)),
        ],
        out_specs=pl.BlockSpec((n, c_out, tj), lambda i: (0, 0, 0)),
        compiler_params=pltpu.CompilerParams(
            dimension_semantics=("arbitrary",)),
        cost_estimate=pl.CostEstimate(
            flops=int(flops), transcendentals=int(c_out),
            bytes_accessed=int(bytes_accessed)),
    )(x1f, g, wa, wb, gamma.reshape(c_out, 1), beta.reshape(c_out, 1))

    # Append trailing size-1 width dim -> PyTorch NCHW (N, Cout, TJ, 1). Free.
    return out[..., None]


largegcn_forward = jax.jit(_largegcn_forward_impl)


def largegcn_reference(x1, g, w, w1, gamma, beta):
    """Pure-JAX reference mirroring the PyTorch forward step-by-step."""
    x = jnp.transpose(x1, (0, 3, 2, 1))                   # (N,1,TJ,Cin)
    x = jnp.einsum("ts,nosc->notc", g, x)                 # g @ x (broadcast)
    x = jnp.transpose(x, (0, 3, 2, 1))                    # (N,Cin,TJ,1)
    z = (jnp.einsum("oc,nctj->notj", w, x)
         + jnp.einsum("oc,nctj->notj", w1, x1))           # 1x1 convs, no bias
    mean = jnp.mean(z, axis=(0, 2, 3), keepdims=True)
    var = jnp.mean((z - mean) ** 2, axis=(0, 2, 3), keepdims=True)
    zn = (z - mean) / jnp.sqrt(var + BN_EPS)
    zn = zn * gamma.reshape(1, -1, 1, 1) + beta.reshape(1, -1, 1, 1)
    return jnp.maximum(zn, 0.0)


if __name__ == "__main__":
    # Shapes implied by the module: the hard-coded view(N, C, 25, 20) forces TJ = 500.
    N, C_IN, C_OUT, TJ = 2, 4, 8, 25 * 20

    key = jax.random.PRNGKey(0)
    k_x, k_g, k_w, k_w1, k_gm, k_bt = jax.random.split(key, 6)

    x1 = jax.random.normal(k_x, (N, C_IN, TJ, 1), dtype=jnp.float32)
    g = jax.random.normal(k_g, (TJ, TJ), dtype=jnp.float32) * 0.05
    # Conv2d(dim1, dim2, kernel_size=1, bias=False) weights -> (Cout, Cin)
    w = jax.random.normal(k_w, (C_OUT, C_IN), dtype=jnp.float32) * 0.1
    w1 = jax.random.normal(k_w1, (C_OUT, C_IN), dtype=jnp.float32) * 0.1
    # BatchNorm2d affine params (PyTorch init is gamma=1, beta=0; perturb to exercise affine)
    gamma = 1.0 + 0.1 * jax.random.normal(k_gm, (C_OUT,), dtype=jnp.float32)
    beta = 0.1 * jax.random.normal(k_bt, (C_OUT,), dtype=jnp.float32)

    # Parameter-style precompute, done ONCE (not per forward call).
    wa, wb = make_largegcn_params(w, w1, N)
    wa = jax.block_until_ready(wa)
    wb = jax.block_until_ready(wb)

    out = largegcn_forward(x1, g, wa, wb, gamma, beta)
    out = jax.block_until_ready(out)

    ref = jax.block_until_ready(largegcn_reference(x1, g, w, w1, gamma, beta))

    assert out.shape == (N, C_OUT, TJ, 1), out.shape
    assert jnp.allclose(out, ref, atol=1e-3, rtol=1e-3), float(jnp.max(jnp.abs(out - ref)))

    print("KERNEL_OK")
</pallas_src>

<mosaic_0001>
module attributes {stable_mosaic.version = 11 : i64} {
  func.func @largegcn_kernel(%arg0: i32, %arg1: memref<8x500xf32, #tpu.memory_space<vmem>>, %arg2: memref<500x500xf32, #tpu.memory_space<vmem>>, %arg3: memref<16x8xf32, #tpu.memory_space<vmem>>, %arg4: memref<16x8xf32, #tpu.memory_space<vmem>>, %arg5: memref<8x1xf32, #tpu.memory_space<vmem>>, %arg6: memref<8x1xf32, #tpu.memory_space<vmem>>, %arg7: memref<2x8x500xf32, #tpu.memory_space<vmem>>) attributes {dimension_semantics = [#tpu.dimension_semantics<arbitrary>], iteration_bounds = array<i64: 1>, scalar_prefetch = 0 : i64, scratch_operands = 0 : i64, tpu.core_type = #tpu.core_type<tc>, window_params = [{pipeline_mode = #tpu.pipeline_mode<synchronous>, transform_indices = @transform_0, window_bounds = array<i64: 8, 500>}, {pipeline_mode = #tpu.pipeline_mode<synchronous>, transform_indices = @transform_1, window_bounds = array<i64: 500, 500>}, {pipeline_mode = #tpu.pipeline_mode<synchronous>, transform_indices = @transform_2, window_bounds = array<i64: 16, 8>}, {pipeline_mode = #tpu.pipeline_mode<synchronous>, transform_indices = @transform_3, window_bounds = array<i64: 16, 8>}, {pipeline_mode = #tpu.pipeline_mode<synchronous>, transform_indices = @transform_4, window_bounds = array<i64: 8, 1>}, {pipeline_mode = #tpu.pipeline_mode<synchronous>, transform_indices = @transform_5, window_bounds = array<i64: 8, 1>}, {pipeline_mode = #tpu.pipeline_mode<synchronous>, transform_indices = @transform_6, window_bounds = array<i64: 2, 8, 500>}]} {
    %c0 = arith.constant 0 : index
    %c0_0 = arith.constant 0 : index
    %0 = vector.load %arg1[%c0, %c0_0] : memref<8x500xf32, #tpu.memory_space<vmem>>, vector<8x500xf32>
    %c0_1 = arith.constant 0 : index
    %c0_2 = arith.constant 0 : index
    %1 = vector.load %arg2[%c0_1, %c0_2] : memref<500x500xf32, #tpu.memory_space<vmem>>, vector<500x500xf32>
    %cst = arith.constant dense<0.000000e+00> : vector<8x500xf32>
    %2 = tpu.matmul %0, %1, %cst {dimension_numbers = #tpu.dot_dimension_numbers<[1], [1], [0], [0], [0, 0, 1, 0], [], []>} : vector<8x500xf32>, vector<500x500xf32>, vector<8x500xf32> -> vector<8x500xf32>
    %c0_3 = arith.constant 0 : index
    %c0_4 = arith.constant 0 : index
    %3 = vector.load %arg3[%c0_3, %c0_4] : memref<16x8xf32, #tpu.memory_space<vmem>>, vector<16x8xf32>
    %cst_5 = arith.constant dense<0.000000e+00> : vector<16x500xf32>
    %4 = tpu.matmul %3, %2, %cst_5 {dimension_numbers = #tpu.dot_dimension_numbers<[1], [0], [0], [1], [0, 0, 1, 1], [], []>} : vector<16x8xf32>, vector<8x500xf32>, vector<16x500xf32> -> vector<16x500xf32>
    %c0_6 = arith.constant 0 : index
    %c0_7 = arith.constant 0 : index
    %5 = vector.load %arg4[%c0_6, %c0_7] : memref<16x8xf32, #tpu.memory_space<vmem>>, vector<16x8xf32>
    %cst_8 = arith.constant dense<0.000000e+00> : vector<16x500xf32>
    %6 = tpu.matmul %5, %0, %cst_8 {dimension_numbers = #tpu.dot_dimension_numbers<[1], [0], [0], [1], [0, 0, 1, 1], [], []>} : vector<16x8xf32>, vector<8x500xf32>, vector<16x500xf32> -> vector<16x500xf32>
    %7 = arith.addf %4, %6 : vector<16x500xf32>
    %8 = vector.shape_cast %7 : vector<16x500xf32> to vector<2x8x500xf32>
    %cst_9 = arith.constant dense<0.000000e+00> : vector<2x8xf32>
    %9 = vector.multi_reduction <add>, %8, %cst_9 [2] : vector<2x8x500xf32> to vector<2x8xf32>
    %10 = vector.shape_cast %9 : vector<2x8xf32> to vector<2x8x1xf32>
    %cst_10 = arith.constant dense<0.000000e+00> : vector<8x1xf32>
    %11 = vector.multi_reduction <add>, %10, %cst_10 [0] : vector<2x8x1xf32> to vector<8x1xf32>
    %12 = vector.shape_cast %11 : vector<8x1xf32> to vector<1x8x1xf32>
    %cst_11 = arith.constant 1.000000e-03 : f32
    %13 = vector.broadcast %cst_11 : f32 to vector<1x8x1xf32>
    %14 = arith.mulf %12, %13 : vector<1x8x1xf32>
    %15 = vector.broadcast %14 : vector<1x8x1xf32> to vector<2x8x500xf32>
    %16 = arith.subf %8, %15 : vector<2x8x500xf32>
    %17 = arith.mulf %16, %16 : vector<2x8x500xf32>
    %cst_12 = arith.constant dense<0.000000e+00> : vector<2x8xf32>
    %18 = vector.multi_reduction <add>, %17, %cst_12 [2] : vector<2x8x500xf32> to vector<2x8xf32>
    %19 = vector.shape_cast %18 : vector<2x8xf32> to vector<2x8x1xf32>
    %cst_13 = arith.constant dense<0.000000e+00> : vector<8x1xf32>
    %20 = vector.multi_reduction <add>, %19, %cst_13 [0] : vector<2x8x1xf32> to vector<8x1xf32>
    %21 = vector.shape_cast %20 : vector<8x1xf32> to vector<1x8x1xf32>
    %cst_14 = arith.constant 1.000000e-03 : f32
    %22 = vector.broadcast %cst_14 : f32 to vector<1x8x1xf32>
    %23 = arith.mulf %21, %22 : vector<1x8x1xf32>
    %c0_15 = arith.constant 0 : index
    %c0_16 = arith.constant 0 : index
    %24 = vector.load %arg5[%c0_15, %c0_16] : memref<8x1xf32, #tpu.memory_space<vmem>>, vector<8x1xf32>
    %cst_17 = arith.constant 9.99999974E-6 : f32
    %25 = vector.broadcast %cst_17 : f32 to vector<1x8x1xf32>
    %26 = arith.addf %23, %25 : vector<1x8x1xf32>
    %27 = math.rsqrt %26 : vector<1x8x1xf32>
    %28 = vector.shape_cast %24 : vector<8x1xf32> to vector<1x8x1xf32>
    %29 = arith.mulf %28, %27 : vector<1x8x1xf32>
    %30 = vector.broadcast %29 : vector<1x8x1xf32> to vector<2x8x500xf32>
    %31 = arith.mulf %16, %30 : vector<2x8x500xf32>
    %c0_18 = arith.constant 0 : index
    %c0_19 = arith.constant 0 : index
    %32 = vector.load %arg6[%c0_18, %c0_19] : memref<8x1xf32, #tpu.memory_space<vmem>>, vector<8x1xf32>
    %33 = vector.shape_cast %32 : vector<8x1xf32> to vector<1x8x1xf32>
    %34 = vector.broadcast %33 : vector<1x8x1xf32> to vector<2x8x500xf32>
    %35 = arith.addf %31, %34 : vector<2x8x500xf32>
    %cst_20 = arith.constant 0.000000e+00 : f32
    %36 = vector.broadcast %cst_20 : f32 to vector<2x8x500xf32>
    %37 = arith.maximumf %35, %36 : vector<2x8x500xf32>
    %c0_21 = arith.constant 0 : index
    %c0_22 = arith.constant 0 : index
    %c0_23 = arith.constant 0 : index
    %38 = vector.load %arg7[%c0_21, %c0_22, %c0_23] : memref<2x8x500xf32, #tpu.memory_space<vmem>>, vector<2x8x500xf32>
    tpu.vector_store %arg7[%c0_21, %c0_22, %c0_23], %37 {strides = array<i32>} : memref<2x8x500xf32, #tpu.memory_space<vmem>>, vector<2x8x500xf32>,
    return
  }
  func.func @transform_0(%arg0: i32) -> (i32, i32) {
    %c0_i32 = arith.constant 0 : i32
    %c0_i32_0 = arith.constant 0 : i32
    %c0_i32_1 = arith.constant 0 : i32
    return %c0_i32, %c0_i32_0 : i32, i32
  }
  func.func @transform_1(%arg0: i32) -> (i32, i32) {
    %c0_i32 = arith.constant 0 : i32
    %c0_i32_0 = arith.constant 0 : i32
    %c0_i32_1 = arith.constant 0 : i32
    return %c0_i32, %c0_i32_0 : i32, i32
  }
  func.func @transform_2(%arg0: i32) -> (i32, i32) {
    %c0_i32 = arith.constant 0 : i32
    %c0_i32_0 = arith.constant 0 : i32
    %c0_i32_1 = arith.constant 0 : i32
    return %c0_i32, %c0_i32_0 : i32, i32
  }
  func.func @transform_3(%arg0: i32) -> (i32, i32) {
    %c0_i32 = arith.constant 0 : i32
    %c0_i32_0 = arith.constant 0 : i32
    %c0_i32_1 = arith.constant 0 : i32
    return %c0_i32, %c0_i32_0 : i32, i32
  }
  func.func @transform_4(%arg0: i32) -> (i32, i32) {
    %c0_i32 = arith.constant 0 : i32
    %c0_i32_0 = arith.constant 0 : i32
    %c0_i32_1 = arith.constant 0 : i32
    return %c0_i32, %c0_i32_0 : i32, i32
  }
  func.func @transform_5(%arg0: i32) -> (i32, i32) {
    %c0_i32 = arith.constant 0 : i32
    %c0_i32_0 = arith.constant 0 : i32
    %c0_i32_1 = arith.constant 0 : i32
    return %c0_i32, %c0_i32_0 : i32, i32
  }
  func.func @transform_6(%arg0: i32) -> (i32, i32, i32) {
    %c0_i32 = arith.constant 0 : i32
    %c0_i32_0 = arith.constant 0 : i32
    %c0_i32_1 = arith.constant 0 : i32
    %c0_i32_2 = arith.constant 0 : i32
    return %c0_i32, %c0_i32_0, %c0_i32_1 : i32, i32, i32
  }
}

</mosaic_0001>

<llo_original>
// kernel: _largegcn_forward_impl.1
$region0: #{_largegcn_forward_impl.1}
  #allocation0 [shape = 'u32[]', space=smem, size = 0x4, offset = 0x4, fixed_abs, tag = 'smem constant byte address 0x4 - core index']
  #allocation1 [shape = 'u32[72,128]{1,0:T(1,128)}', space=vmem, size = 0x9000, scoped, tag = 'internal scratch']
  %s0 = inlined_call_operand.vmem [shape: f32[8,500], index: 0, kind: input, shape index: {}]
  %s1 = inlined_call_operand.hbm [shape: f32[500,500], index: 1, kind: input, shape index: {}]
  %s2 = inlined_call_operand.vmem [shape: f32[16,8], index: 2, kind: input, shape index: {}]
  %s3 = inlined_call_operand.vmem [shape: f32[16,8], index: 3, kind: input, shape index: {}]
  %s4 = inlined_call_operand.vmem [shape: f32[8,1], index: 4, kind: input, shape index: {}]
  %s5 = inlined_call_operand.vmem [shape: f32[8,1], index: 5, kind: input, shape index: {}]
  %s6 = inlined_call_operand.vmem [shape: f32[2,8,500], index: 6, kind: output, shape index: {}]
  %s7 = sld [smem:[#allocation0]]
  $region38: #{_largegcn_forward_impl.1} parent=0
    _
  %s9 = ssub.s32 1, %s7
  %s10 = scalar_select 0, %s9, %s7
  $region1: #{_largegcn_forward_impl.1} parent=0
    #allocation2 [shape = 'u8[1032192]{0}', space=vmem, size = 0xfc000, scoped, tag = 'input window, operand 1, single buffered']
    #allocation3 [shape = 's32[1]{0}', space=sflag, size = 0x4, scoped, tag = 'scoped memory for _largegcn_forward_impl.1']
    %11 = vsyncpa [#allocation3], 0
    // Predicated region
    $region2: #{_largegcn_forward_impl.1} parent=1 // pred_check
      _
    $region3: #{_largegcn_forward_impl.1} parent=1 // pred_check_branch
      %13 = sbr.rel (0) target = $region5
    $region4: #{_largegcn_forward_impl.1} parent=1 // pred_region
      _
    $region5: #{_largegcn_forward_impl.1} parent=1 // pred_fallthru
      _
    // Predicated region
    $region6: #{_largegcn_forward_impl.1} parent=1 // pred_check
      _
    $region7: #{_largegcn_forward_impl.1} parent=1 // pred_check_branch
      %15 = sbr.rel (0) target = $region9
    $region8: #{_largegcn_forward_impl.1} parent=1 // pred_region
      %17 = vsyncadd [#allocation3], 0
      %s18 = sshll.u32 %s1, 4
      %s19 = int_to_ptr.hbm [resolvable:$true] %s18
      %s20 = sshll.u32 [#allocation2], 4
      %s21 = int_to_ptr.vmem [resolvable:$true] %s20
      %26 = dma.hbm_to_vmem [thread:$0]  %s19, 32256, %s21, [#allocation3], 512, 512, 32
    $region9: #{_largegcn_forward_impl.1} parent=1 // pred_fallthru
      _
    // Predicated region
    $region10: #{_largegcn_forward_impl.1} parent=1 // pred_check
      _
    $region11: #{_largegcn_forward_impl.1} parent=1 // pred_check_branch
      %28 = sbr.rel (0) target = $region13
    $region12: #{_largegcn_forward_impl.1} parent=1 // pred_region
      _
    $region13: #{_largegcn_forward_impl.1} parent=1 // pred_fallthru
      _
    // Predicated region
    $region14: #{_largegcn_forward_impl.1} parent=1 // pred_check
      _
    $region15: #{_largegcn_forward_impl.1} parent=1 // pred_check_branch
      %30 = sbr.rel (0) target = $region17
    $region16: #{_largegcn_forward_impl.1} parent=1 // pred_region
      _
    $region17: #{_largegcn_forward_impl.1} parent=1 // pred_fallthru
      _
    // Predicated region
    $region18: #{_largegcn_forward_impl.1} parent=1 // pred_check
      _
    $region19: #{_largegcn_forward_impl.1} parent=1 // pred_check_branch
      %32 = sbr.rel (0) target = $region21
    $region20: #{_largegcn_forward_impl.1} parent=1 // pred_region
      _
    $region21: #{_largegcn_forward_impl.1} parent=1 // pred_fallthru
      _
    // Predicated region
    $region22: #{_largegcn_forward_impl.1} parent=1 // pred_check
      _
    $region23: #{_largegcn_forward_impl.1} parent=1 // pred_check_branch
      %34 = sbr.rel (0) target = $region25
    $region24: #{_largegcn_forward_impl.1} parent=1 // pred_region
      _
    $region25: #{_largegcn_forward_impl.1} parent=1 // pred_fallthru
      _
    // Predicated region
    $region26: #{_largegcn_forward_impl.1} parent=1 // pred_check
      _
    $region27: #{_largegcn_forward_impl.1} parent=1 // pred_check_branch
      %36 = sbr.rel (0) target = $region29
    $region28: #{_largegcn_forward_impl.1} parent=1 // pred_region
      %38 = dma.done [#allocation3], 32256
    $region29: #{_largegcn_forward_impl.1} parent=1 // pred_fallthru
      _
    %v39 = vld [vmem:[%s0] sm:$0xff]
    %v40 = vld [vmem:[%s0 + $0x8] sm:$0xff]
    %v41 = vld [vmem:[%s0 + $0x10] sm:$0xff]
    %v42 = vld [vmem:[%s0 + $0x18] sm:$0xff]
    %v43 = vld [vmem:[#allocation2] sm:$0xff]
    %v44 = vld [vmem:[#allocation2 + $0x8] sm:$0xff]
    %v45 = vld [vmem:[#allocation2 + $0x10] sm:$0xff]
    %v46 = vld [vmem:[#allocation2 + $0x18] sm:$0xff]
    %v47 = vld [vmem:[#allocation2 + $0x20] sm:$0xff]
    %v48 = vld [vmem:[#allocation2 + $0x28] sm:$0xff]
    %v49 = vld [vmem:[#allocation2 + $0x30] sm:$0xff]
    %v50 = vld [vmem:[#allocation2 + $0x38] sm:$0xff]
    %v51 = vld [vmem:[#allocation2 + $0x40] sm:$0xff]
    %v52 = vld [vmem:[#allocation2 + $0x48] sm:$0xff]
    %v53 = vld [vmem:[#allocation2 + $0x50] sm:$0xff]
    %v54 = vld [vmem:[#allocation2 + $0x58] sm:$0xff]
    %v55 = vld [vmem:[#allocation2 + $0x60] sm:$0xff]
    %v56 = vld [vmem:[#allocation2 + $0x68] sm:$0xff]
    %v57 = vld [vmem:[#allocation2 + $0x70] sm:$0xff]
    %v58 = vld [vmem:[#allocation2 + $0x78] sm:$0xff]
    %v59 = vld [vmem:[#allocation2 + $0x80] sm:$0xff]
    %v60 = vld [vmem:[#allocation2 + $0x88] sm:$0xff]
    %v61 = vld [vmem:[#allocation2 + $0x90] sm:$0xff]
    %v62 = vld [vmem:[#allocation2 + $0x98] sm:$0xff]
    %v63 = vld [vmem:[#allocation2 + $0xa0] sm:$0xff]
    %v64 = vld [vmem:[#allocation2 + $0xa8] sm:$0xff]
    %v65 = vld [vmem:[#allocation2 + $0xb0] sm:$0xff]
    %v66 = vld [vmem:[#allocation2 + $0xb8] sm:$0xff]
    %v67 = vld [vmem:[#allocation2 + $0xc0] sm:$0xff]
    %v68 = vld [vmem:[#allocation2 + $0xc8] sm:$0xff]
    %v69 = vld [vmem:[#allocation2 + $0xd0] sm:$0xff]
    %v70 = vld [vmem:[#allocation2 + $0xd8] sm:$0xff]
    %v71 = vld [vmem:[#allocation2 + $0xe0] sm:$0xff]
    %v72 = vld [vmem:[#allocation2 + $0xe8] sm:$0xff]
    %v73 = vld [vmem:[#allocation2 + $0xf0] sm:$0xff]
    %v74 = vld [vmem:[#allocation2 + $0xf8] sm:$0xff]
    %v75 = vld [vmem:[#allocation2 + $0x100] sm:$0xff]
    %v76 = vld [vmem:[#allocation2 + $0x108] sm:$0xff]
    %v77 = vld [vmem:[#allocation2 + $0x110] sm:$0xff]
    %v78 = vld [vmem:[#allocation2 + $0x118] sm:$0xff]
    %v79 = vld [vmem:[#allocation2 + $0x120] sm:$0xff]
    %v80 = vld [vmem:[#allocation2 + $0x128] sm:$0xff]
    %v81 = vld [vmem:[#allocation2 + $0x130] sm:$0xff]
    %v82 = vld [vmem:[#allocation2 + $0x138] sm:$0xff]
    %v83 = vld [vmem:[#allocation2 + $0x140] sm:$0xff]
    %v84 = vld [vmem:[#allocation2 + $0x148] sm:$0xff]
    %v85 = vld [vmem:[#allocation2 + $0x150] sm:$0xff]
    %v86 = vld [vmem:[#allocation2 + $0x158] sm:$0xff]
    %v87 = vld [vmem:[#allocation2 + $0x160] sm:$0xff]
    %v88 = vld [vmem:[#allocation2 + $0x168] sm:$0xff]
    %v89 = vld [vmem:[#allocation2 + $0x170] sm:$0xff]
    %v90 = vld [vmem:[#allocation2 + $0x178] sm:$0xff]
    %v91 = vld [vmem:[#allocation2 + $0x180] sm:$0xff]
    %v92 = vld [vmem:[#allocation2 + $0x188] sm:$0xff]
    %v93 = vld [vmem:[#allocation2 + $0x190] sm:$0xff]
    %v94 = vld [vmem:[#allocation2 + $0x198] sm:$0xff]
    %v95 = vld [vmem:[#allocation2 + $0x1a0] sm:$0xff]
    %v96 = vld [vmem:[#allocation2 + $0x1a8] sm:$0xff]
    %v97 = vld [vmem:[#allocation2 + $0x1b0] sm:$0xff]
    %v98 = vld [vmem:[#allocation2 + $0x1b8] sm:$0xff]
    %v99 = vld [vmem:[#allocation2 + $0x1c0] sm:$0xff]
    %v100 = vld [vmem:[#allocation2 + $0x1c8] sm:$0xff]
    %v101 = vld [vmem:[#allocation2 + $0x1d0] sm:$0xff]
    %v102 = vld [vmem:[#allocation2 + $0x1d8] sm:$0xff]
    %v103 = vld [vmem:[#allocation2 + $0x1e0] sm:$0xff]
    %v104 = vld [vmem:[#allocation2 + $0x1e8] sm:$0xff]
    %v105 = vld [vmem:[#allocation2 + $0x1f0] sm:$0xff]
    %v106 = vld [vmem:[#allocation2 + $0x1f8] sm:$0xff]
    %v107 = vld [vmem:[#allocation2 + $0x200] sm:$0xff]
    %v108 = vld [vmem:[#allocation2 + $0x208] sm:$0xff]
    %v109 = vld [vmem:[#allocation2 + $0x210] sm:$0xff]
    %v110 = vld [vmem:[#allocation2 + $0x218] sm:$0xff]
    %v111 = vld [vmem:[#allocation2 + $0x220] sm:$0xff]
    %v112 = vld [vmem:[#allocation2 + $0x228] sm:$0xff]
    %v113 = vld [vmem:[#allocation2 + $0x230] sm:$0xff]
    %v114 = vld [vmem:[#allocation2 + $0x238] sm:$0xff]
    %v115 = vld [vmem:[#allocation2 + $0x240] sm:$0xff]
    %v116 = vld [vmem:[#allocation2 + $0x248] sm:$0xff]
    %v117 = vld [vmem:[#allocation2 + $0x250] sm:$0xff]
    %v118 = vld [vmem:[#allocation2 + $0x258] sm:$0xff]
    %v119 = vld [vmem:[#allocation2 + $0x260] sm:$0xff]
    %v120 = vld [vmem:[#allocation2 + $0x268] sm:$0xff]
    %v121 = vld [vmem:[#allocation2 + $0x270] sm:$0xff]
    %v122 = vld [vmem:[#allocation2 + $0x278] sm:$0xff]
    %v123 = vld [vmem:[#allocation2 + $0x280] sm:$0xff]
    %v124 = vld [vmem:[#allocation2 + $0x288] sm:$0xff]
    %v125 = vld [vmem:[#allocation2 + $0x290] sm:$0xff]
    %v126 = vld [vmem:[#allocation2 + $0x298] sm:$0xff]
    %v127 = vld [vmem:[#allocation2 + $0x2a0] sm:$0xff]
    %v128 = vld [vmem:[#allocation2 + $0x2a8] sm:$0xff]
    %v129 = vld [vmem:[#allocation2 + $0x2b0] sm:$0xff]
    %v130 = vld [vmem:[#allocation2 + $0x2b8] sm:$0xff]
    %v131 = vld [vmem:[#allocation2 + $0x2c0] sm:$0xff]
    %v132 = vld [vmem:[#allocation2 + $0x2c8] sm:$0xff]
    %v133 = vld [vmem:[#allocation2 + $0x2d0] sm:$0xff]
    %v134 = vld [vmem:[#allocation2 + $0x2d8] sm:$0xff]
    %v135 = vld [vmem:[#allocation2 + $0x2e0] sm:$0xff]
    %v136 = vld [vmem:[#allocation2 + $0x2e8] sm:$0xff]
    %v137 = vld [vmem:[#allocation2 + $0x2f0] sm:$0xff]
    %v138 = vld [vmem:[#allocation2 + $0x2f8] sm:$0xff]
    %v139 = vld [vmem:[#allocation2 + $0x300] sm:$0xff]
    %v140 = vld [vmem:[#allocation2 + $0x308] sm:$0xff]
    %v141 = vld [vmem:[#allocation2 + $0x310] sm:$0xff]
    %v142 = vld [vmem:[#allocation2 + $0x318] sm:$0xff]
    %v143 = vld [vmem:[#allocation2 + $0x320] sm:$0xff]
    %v144 = vld [vmem:[#allocation2 + $0x328] sm:$0xff]
    %v145 = vld [vmem:[#allocation2 + $0x330] sm:$0xff]
    %v146 = vld [vmem:[#allocation2 + $0x338] sm:$0xff]
    %v147 = vld [vmem:[#allocation2 + $0x340] sm:$0xff]
    %v148 = vld [vmem:[#allocation2 + $0x348] sm:$0xff]
    %v149 = vld [vmem:[#allocation2 + $0x350] sm:$0xff]
    %v150 = vld [vmem:[#allocation2 + $0x358] sm:$0xff]
    %v151 = vld [vmem:[#allocation2 + $0x360] sm:$0xff]
    %v152 = vld [vmem:[#allocation2 + $0x368] sm:$0xff]
    %v153 = vld [vmem:[#allocation2 + $0x370] sm:$0xff]
    %v154 = vld [vmem:[#allocation2 + $0x378] sm:$0xff]
    %v155 = vld [vmem:[#allocation2 + $0x380] sm:$0xff]
    %v156 = vld [vmem:[#allocation2 + $0x388] sm:$0xff]
    %v157 = vld [vmem:[#allocation2 + $0x390] sm:$0xff]
    %v158 = vld [vmem:[#allocation2 + $0x398] sm:$0xff]
    %v159 = vld [vmem:[#allocation2 + $0x3a0] sm:$0xff]
    %v160 = vld [vmem:[#allocation2 + $0x3a8] sm:$0xff]
    %v161 = vld [vmem:[#allocation2 + $0x3b0] sm:$0xff]
    %v162 = vld [vmem:[#allocation2 + $0x3b8] sm:$0xff]
    %v163 = vld [vmem:[#allocation2 + $0x3c0] sm:$0xff]
    %v164 = vld [vmem:[#allocation2 + $0x3c8] sm:$0xff]
    %v165 = vld [vmem:[#allocation2 + $0x3d0] sm:$0xff]
    %v166 = vld [vmem:[#allocation2 + $0x3d8] sm:$0xff]
    %v167 = vld [vmem:[#allocation2 + $0x3e0] sm:$0xff]
    %v168 = vld [vmem:[#allocation2 + $0x3e8] sm:$0xff]
    %v169 = vld [vmem:[#allocation2 + $0x3f0] sm:$0xff]
    %v170 = vld [vmem:[#allocation2 + $0x3f8] sm:$0xff]
    %v171 = vld [vmem:[#allocation2 + $0x400] sm:$0xff]
    %v172 = vld [vmem:[#allocation2 + $0x408] sm:$0xff]
    %v173 = vld [vmem:[#allocation2 + $0x410] sm:$0xff]
    %v174 = vld [vmem:[#allocation2 + $0x418] sm:$0xff]
    %v175 = vld [vmem:[#allocation2 + $0x420] sm:$0xff]
    %v176 = vld [vmem:[#allocation2 + $0x428] sm:$0xff]
    %v177 = vld [vmem:[#allocation2 + $0x430] sm:$0xff]
    %v178 = vld [vmem:[#allocation2 + $0x438] sm:$0xff]
    %v179 = vld [vmem:[#allocation2 + $0x440] sm:$0xff]
    %v180 = vld [vmem:[#allocation2 + $0x448] sm:$0xff]
    %v181 = vld [vmem:[#allocation2 + $0x450] sm:$0xff]
    %v182 = vld [vmem:[#allocation2 + $0x458] sm:$0xff]
    %v183 = vld [vmem:[#allocation2 + $0x460] sm:$0xff]
    %v184 = vld [vmem:[#allocation2 + $0x468] sm:$0xff]
    %v185 = vld [vmem:[#allocation2 + $0x470] sm:$0xff]
    %v186 = vld [vmem:[#allocation2 + $0x478] sm:$0xff]
    %v187 = vld [vmem:[#allocation2 + $0x480] sm:$0xff]
    %v188 = vld [vmem:[#allocation2 + $0x488] sm:$0xff]
    %v189 = vld [vmem:[#allocation2 + $0x490] sm:$0xff]
    %v190 = vld [vmem:[#allocation2 + $0x498] sm:$0xff]
    %v191 = vld [vmem:[#allocation2 + $0x4a0] sm:$0xff]
    %v192 = vld [vmem:[#allocation2 + $0x4a8] sm:$0xff]
    %v193 = vld [vmem:[#allocation2 + $0x4b0] sm:$0xff]
    %v194 = vld [vmem:[#allocation2 + $0x4b8] sm:$0xff]
    %v195 = vld [vmem:[#allocation2 + $0x4c0] sm:$0xff]
    %v196 = vld [vmem:[#allocation2 + $0x4c8] sm:$0xff]
    %v197 = vld [vmem:[#allocation2 + $0x4d0] sm:$0xff]
    %v198 = vld [vmem:[#allocation2 + $0x4d8] sm:$0xff]
    %v199 = vld [vmem:[#allocation2 + $0x4e0] sm:$0xff]
    %v200 = vld [vmem:[#allocation2 + $0x4e8] sm:$0xff]
    %v201 = vld [vmem:[#allocation2 + $0x4f0] sm:$0xff]
    %v202 = vld [vmem:[#allocation2 + $0x4f8] sm:$0xff]
    %v203 = vld [vmem:[#allocation2 + $0x500] sm:$0xff]
    %v204 = vld [vmem:[#allocation2 + $0x508] sm:$0xff]
    %v205 = vld [vmem:[#allocation2 + $0x510] sm:$0xff]
    %v206 = vld [vmem:[#allocation2 + $0x518] sm:$0xff]
    %v207 = vld [vmem:[#allocation2 + $0x520] sm:$0xff]
    %v208 = vld [vmem:[#allocation2 + $0x528] sm:$0xff]
    %v209 = vld [vmem:[#allocation2 + $0x530] sm:$0xff]
    %v210 = vld [vmem:[#allocation2 + $0x538] sm:$0xff]
    %v211 = vld [vmem:[#allocation2 + $0x540] sm:$0xff]
    %v212 = vld [vmem:[#allocation2 + $0x548] sm:$0xff]
    %v213 = vld [vmem:[#allocation2 + $0x550] sm:$0xff]
    %v214 = vld [vmem:[#allocation2 + $0x558] sm:$0xff]
    %v215 = vld [vmem:[#allocation2 + $0x560] sm:$0xff]
    %v216 = vld [vmem:[#allocation2 + $0x568] sm:$0xff]
    %v217 = vld [vmem:[#allocation2 + $0x570] sm:$0xff]
    %v218 = vld [vmem:[#allocation2 + $0x578] sm:$0xff]
    %v219 = vld [vmem:[#allocation2 + $0x580] sm:$0xff]
    %v220 = vld [vmem:[#allocation2 + $0x588] sm:$0xff]
    %v221 = vld [vmem:[#allocation2 + $0x590] sm:$0xff]
    %v222 = vld [vmem:[#allocation2 + $0x598] sm:$0xff]
    %v223 = vld [vmem:[#allocation2 + $0x5a0] sm:$0xff]
    %v224 = vld [vmem:[#allocation2 + $0x5a8] sm:$0xff]
    %v225 = vld [vmem:[#allocation2 + $0x5b0] sm:$0xff]
    %v226 = vld [vmem:[#allocation2 + $0x5b8] sm:$0xff]
    %v227 = vld [vmem:[#allocation2 + $0x5c0] sm:$0xff]
    %v228 = vld [vmem:[#allocation2 + $0x5c8] sm:$0xff]
    %v229 = vld [vmem:[#allocation2 + $0x5d0] sm:$0xff]
    %v230 = vld [vmem:[#allocation2 + $0x5d8] sm:$0xff]
    %v231 = vld [vmem:[#allocation2 + $0x5e0] sm:$0xff]
    %v232 = vld [vmem:[#allocation2 + $0x5e8] sm:$0xff]
    %v233 = vld [vmem:[#allocation2 + $0x5f0] sm:$0xff]
    %v234 = vld [vmem:[#allocation2 + $0x5f8] sm:$0xff]
    %v235 = vld [vmem:[#allocation2 + $0x600] sm:$0xff]
    %v236 = vld [vmem:[#allocation2 + $0x608] sm:$0xff]
    %v237 = vld [vmem:[#allocation2 + $0x610] sm:$0xff]
    %v238 = vld [vmem:[#allocation2 + $0x618] sm:$0xff]
    %v239 = vld [vmem:[#allocation2 + $0x620] sm:$0xff]
    %v240 = vld [vmem:[#allocation2 + $0x628] sm:$0xff]
    %v241 = vld [vmem:[#allocation2 + $0x630] sm:$0xff]
    %v242 = vld [vmem:[#allocation2 + $0x638] sm:$0xff]
    %v243 = vld [vmem:[#allocation2 + $0x640] sm:$0xff]
    %v244 = vld [vmem:[#allocation2 + $0x648] sm:$0xff]
    %v245 = vld [vmem:[#allocation2 + $0x650] sm:$0xff]
    %v246 = vld [vmem:[#allocation2 + $0x658] sm:$0xff]
    %v247 = vld [vmem:[#allocation2 + $0x660] sm:$0xff]
    %v248 = vld [vmem:[#allocation2 + $0x668] sm:$0xff]
    %v249 = vld [vmem:[#allocation2 + $0x670] sm:$0xff]
    %v250 = vld [vmem:[#allocation2 + $0x678] sm:$0xff]
    %v251 = vld [vmem:[#allocation2 + $0x680] sm:$0xff]
    %v252 = vld [vmem:[#allocation2 + $0x688] sm:$0xff]
    %v253 = vld [vmem:[#allocation2 + $0x690] sm:$0xff]
    %v254 = vld [vmem:[#allocation2 + $0x698] sm:$0xff]
    %v255 = vld [vmem:[#allocation2 + $0x6a0] sm:$0xff]
    %v256 = vld [vmem:[#allocation2 + $0x6a8] sm:$0xff]
    %v257 = vld [vmem:[#allocation2 + $0x6b0] sm:$0xff]
    %v258 = vld [vmem:[#allocation2 + $0x6b8] sm:$0xff]
    %v259 = vld [vmem:[#allocation2 + $0x6c0] sm:$0xff]
    %v260 = vld [vmem:[#allocation2 + $0x6c8] sm:$0xff]
    %v261 = vld [vmem:[#allocation2 + $0x6d0] sm:$0xff]
    %v262 = vld [vmem:[#allocation2 + $0x6d8] sm:$0xff]
    %v263 = vld [vmem:[#allocation2 + $0x6e0] sm:$0xff]
    %v264 = vld [vmem:[#allocation2 + $0x6e8] sm:$0xff]
    %v265 = vld [vmem:[#allocation2 + $0x6f0] sm:$0xff]
    %v266 = vld [vmem:[#allocation2 + $0x6f8] sm:$0xff]
    %v267 = vld [vmem:[#allocation2 + $0x700] sm:$0xff]
    %v268 = vld [vmem:[#allocation2 + $0x708] sm:$0xff]
    %v269 = vld [vmem:[#allocation2 + $0x710] sm:$0xff]
    %v270 = vld [vmem:[#allocation2 + $0x718] sm:$0xff]
    %v271 = vld [vmem:[#allocation2 + $0x720] sm:$0xff]
    %v272 = vld [vmem:[#allocation2 + $0x728] sm:$0xff]
    %v273 = vld [vmem:[#allocation2 + $0x730] sm:$0xff]
    %v274 = vld [vmem:[#allocation2 + $0x738] sm:$0xff]
    %v275 = vld [vmem:[#allocation2 + $0x740] sm:$0xff]
    %v276 = vld [vmem:[#allocation2 + $0x748] sm:$0xff]
    %v277 = vld [vmem:[#allocation2 + $0x750] sm:$0xff]
    %v278 = vld [vmem:[#allocation2 + $0x758] sm:$0xff]
    %v279 = vld [vmem:[#allocation2 + $0x760] sm:$0xff]
    %v280 = vld [vmem:[#allocation2 + $0x768] sm:$0xff]
    %v281 = vld [vmem:[#allocation2 + $0x770] sm:$0xff]
    %v282 = vld [vmem:[#allocation2 + $0x778] sm:$0xff]
    %v283 = vld [vmem:[#allocation2 + $0x780] sm:$0xff]
    %v284 = vld [vmem:[#allocation2 + $0x788] sm:$0xff]
    %v285 = vld [vmem:[#allocation2 + $0x790] sm:$0xff]
    %v286 = vld [vmem:[#allocation2 + $0x798] sm:$0xff]
    %v287 = vld [vmem:[#allocation2 + $0x7a0] sm:$0xff]
    %v288 = vld [vmem:[#allocation2 + $0x7a8] sm:$0xff]
    %v289 = vld [vmem:[#allocation2 + $0x7b0] sm:$0xff]
    %v290 = vld [vmem:[#allocation2 + $0x7b8] sm:$0xff]
    %v291 = vld [vmem:[#allocation2 + $0x7c0] sm:$0xf]
    %v292 = vld [vmem:[#allocation2 + $0x7c8] sm:$0xf]
    %v293 = vld [vmem:[#allocation2 + $0x7d0] sm:$0xf]
    %v294 = vld [vmem:[#allocation2 + $0x7d8] sm:$0xf]
    %vm295 = vcmask 949248
    %v297 = vsel %vm295, %v42, 0
    %v300 = vsel %vm295, %v46, 0
    %v303 = vsel %vm295, %v50, 0
    %v306 = vsel %vm295, %v54, 0
    %v309 = vsel %vm295, %v58, 0
    %v312 = vsel %vm295, %v62, 0
    %v315 = vsel %vm295, %v66, 0
    %v318 = vsel %vm295, %v70, 0
    %v321 = vsel %vm295, %v74, 0
    %v324 = vsel %vm295, %v78, 0
    %v327 = vsel %vm295, %v82, 0
    %v330 = vsel %vm295, %v86, 0
    %v333 = vsel %vm295, %v90, 0
    %v336 = vsel %vm295, %v94, 0
    %v339 = vsel %vm295, %v98, 0
    %v342 = vsel %vm295, %v102, 0
    %v345 = vsel %vm295, %v106, 0
    %v348 = vsel %vm295, %v110, 0
    %v351 = vsel %vm295, %v114, 0
    %v354 = vsel %vm295, %v118, 0
    %v357 = vsel %vm295, %v122, 0
    %v360 = vsel %vm295, %v126, 0
    %v363 = vsel %vm295, %v130, 0
    %v366 = vsel %vm295, %v134, 0
    %v369 = vsel %vm295, %v138, 0
    %v372 = vsel %vm295, %v142, 0
    %v375 = vsel %vm295, %v146, 0
    %v378 = vsel %vm295, %v150, 0
    %v381 = vsel %vm295, %v154, 0
    %v384 = vsel %vm295, %v158, 0
    %v387 = vsel %vm295, %v162, 0
    %v390 = vsel %vm295, %v166, 0
    %v393 = vsel %vm295, %v170, 0
    %v396 = vsel %vm295, %v174, 0
    %v399 = vsel %vm295, %v178, 0
    %v402 = vsel %vm295, %v182, 0
    %v405 = vsel %vm295, %v186, 0
    %v408 = vsel %vm295, %v190, 0
    %v411 = vsel %vm295, %v194, 0
    %v414 = vsel %vm295, %v198, 0
    %v417 = vsel %vm295, %v202, 0
    %v420 = vsel %vm295, %v206, 0
    %v423 = vsel %vm295, %v210, 0
    %v426 = vsel %vm295, %v214, 0
    %v429 = vsel %vm295, %v218, 0
    %v432 = vsel %vm295, %v222, 0
    %v435 = vsel %vm295, %v226, 0
    %v438 = vsel %vm295, %v230, 0
    %v441 = vsel %vm295, %v234, 0
    %v444 = vsel %vm295, %v238, 0
    %v447 = vsel %vm295, %v242, 0
    %v450 = vsel %vm295, %v246, 0
    %v453 = vsel %vm295, %v250, 0
    %v456 = vsel %vm295, %v254, 0
    %v459 = vsel %vm295, %v258, 0
    %v462 = vsel %vm295, %v262, 0
    %v465 = vsel %vm295, %v266, 0
    %v468 = vsel %vm295, %v270, 0
    %v471 = vsel %vm295, %v274, 0
    %v474 = vsel %vm295, %v278, 0
    %v477 = vsel %vm295, %v282, 0
    %v480 = vsel %vm295, %v286, 0
    %v483 = vsel %vm295, %v290, 0
    %v486 = vsel %vm295, %v294, 0
    %488 = vmatpush.xpose.msra.mxu0 %v103
    %489 = vmatpush.xpose.msra.mxu0 %v99
    %490 = vmatpush.xpose.msra.mxu0 %v95
    %491 = vmatpush.xpose.msra.mxu0 %v91
    %492 = vmatpush.xpose.msra.mxu0 %v87
    %493 = vmatpush.xpose.msra.mxu0 %v83
    %494 = vmatpush.xpose.msra.mxu0 %v79
    %495 = vmatpush.xpose.msra.mxu0 %v75
    %496 = vmatpush.xpose.msra.mxu0 %v71
    %497 = vmatpush.xpose.msra.mxu0 %v67
    %498 = vmatpush.xpose.msra.mxu0 %v63
    %499 = vmatpush.xpose.msra.mxu0 %v59
    %500 = vmatpush.xpose.msra.mxu0 %v55
    %501 = vmatpush.xpose.msra.mxu0 %v51
    %502 = vmatpush.xpose.msra.mxu0 %v47
    %503 = vmatpush.xpose.msra.mxu0 %v43
    %504 = vmatmul.f32.gmra.mxu0 %v39
    %v505 = vpop.f32.mrf.mxu0
    %v506 = vadd.f32 0.0, %v505
    %507 = vdwg.mxu0
    %508 = vmatpush.xpose.msra.mxu0 %v104
    %509 = vmatpush.xpose.msra.mxu0 %v100
    %510 = vmatpush.xpose.msra.mxu0 %v96
    %511 = vmatpush.xpose.msra.mxu0 %v92
    %512 = vmatpush.xpose.msra.mxu0 %v88
    %513 = vmatpush.xpose.msra.mxu0 %v84
    %514 = vmatpush.xpose.msra.mxu0 %v80
    %515 = vmatpush.xpose.msra.mxu0 %v76
    %516 = vmatpush.xpose.msra.mxu0 %v72
    %517 = vmatpush.xpose.msra.mxu0 %v68
    %518 = vmatpush.xpose.msra.mxu0 %v64
    %519 = vmatpush.xpose.msra.mxu0 %v60
    %520 = vmatpush.xpose.msra.mxu0 %v56
    %521 = vmatpush.xpose.msra.mxu0 %v52
    %522 = vmatpush.xpose.msra.mxu0 %v48
    %523 = vmatpush.xpose.msra.mxu0 %v44
    %524 = vmatmul.f32.gmra.mxu0 %v40
    %v525 = vpop.f32.mrf.mxu0
    %v526 = vadd.f32 %v506, %v525
    %527 = vdwg.mxu0
    %528 = vmatpush.xpose.msra.mxu0 %v105
    %529 = vmatpush.xpose.msra.mxu0 %v101
    %530 = vmatpush.xpose.msra.mxu0 %v97
    %531 = vmatpush.xpose.msra.mxu0 %v93
    %532 = vmatpush.xpose.msra.mxu0 %v89
    %533 = vmatpush.xpose.msra.mxu0 %v85
    %534 = vmatpush.xpose.msra.mxu0 %v81
    %535 = vmatpush.xpose.msra.mxu0 %v77
    %536 = vmatpush.xpose.msra.mxu0 %v73
    %537 = vmatpush.xpose.msra.mxu0 %v69
    %538 = vmatpush.xpose.msra.mxu0 %v65
    %539 = vmatpush.xpose.msra.mxu0 %v61
    %540 = vmatpush.xpose.msra.mxu0 %v57
    %541 = vmatpush.xpose.msra.mxu0 %v53
    %542 = vmatpush.xpose.msra.mxu0 %v49
    %543 = vmatpush.xpose.msra.mxu0 %v45
    %544 = vmatmul.f32.gmra.mxu0 %v41
    %v545 = vpop.f32.mrf.mxu0
    %v546 = vadd.f32 %v526, %v545
    %547 = vdwg.mxu0
    %548 = vmatpush.xpose.msra.mxu0 %v345
    %549 = vmatpush.xpose.msra.mxu0 %v342
    %550 = vmatpush.xpose.msra.mxu0 %v339
    %551 = vmatpush.xpose.msra.mxu0 %v336
    %552 = vmatpush.xpose.msra.mxu0 %v333
    %553 = vmatpush.xpose.msra.mxu0 %v330
    %554 = vmatpush.xpose.msra.mxu0 %v327
    %555 = vmatpush.xpose.msra.mxu0 %v324
    %556 = vmatpush.xpose.msra.mxu0 %v321
    %557 = vmatpush.xpose.msra.mxu0 %v318
    %558 = vmatpush.xpose.msra.mxu0 %v315
    %559 = vmatpush.xpose.msra.mxu0 %v312
    %560 = vmatpush.xpose.msra.mxu0 %v309
    %561 = vmatpush.xpose.msra.mxu0 %v306
    %562 = vmatpush.xpose.msra.mxu0 %v303
    %563 = vmatpush.xpose.msra.mxu0 %v300
    %564 = vmatmul.f32.gmra.mxu0 %v297
    %v565 = vpop.f32.mrf.mxu0
    %v566 = vadd.f32 %v546, %v565
    %567 = vdwg.mxu0
    %568 = vmatpush.xpose.msra.mxu0 %v167
    %569 = vmatpush.xpose.msra.mxu0 %v163
    %570 = vmatpush.xpose.msra.mxu0 %v159
    %571 = vmatpush.xpose.msra.mxu0 %v155
    %572 = vmatpush.xpose.msra.mxu0 %v151
    %573 = vmatpush.xpose.msra.mxu0 %v147
    %574 = vmatpush.xpose.msra.mxu0 %v143
    %575 = vmatpush.xpose.msra.mxu0 %v139
    %576 = vmatpush.xpose.msra.mxu0 %v135
    %577 = vmatpush.xpose.msra.mxu0 %v131
    %578 = vmatpush.xpose.msra.mxu0 %v127
    %579 = vmatpush.xpose.msra.mxu0 %v123
    %580 = vmatpush.xpose.msra.mxu0 %v119
    %581 = vmatpush.xpose.msra.mxu0 %v115
    %582 = vmatpush.xpose.msra.mxu0 %v111
    %583 = vmatpush.xpose.msra.mxu0 %v107
    %584 = vmatmul.f32.gmra.mxu0 %v39
    %v585 = vpop.f32.mrf.mxu0
    %v586 = vadd.f32 0.0, %v585
    %587 = vdwg.mxu0
    %588 = vmatpush.xpose.msra.mxu0 %v168
    %589 = vmatpush.xpose.msra.mxu0 %v164
    %590 = vmatpush.xpose.msra.mxu0 %v160
    %591 = vmatpush.xpose.msra.mxu0 %v156
    %592 = vmatpush.xpose.msra.mxu0 %v152
    %593 = vmatpush.xpose.msra.mxu0 %v148
    %594 = vmatpush.xpose.msra.mxu0 %v144
    %595 = vmatpush.xpose.msra.mxu0 %v140
    %596 = vmatpush.xpose.msra.mxu0 %v136
    %597 = vmatpush.xpose.msra.mxu0 %v132
    %598 = vmatpush.xpose.msra.mxu0 %v128
    %599 = vmatpush.xpose.msra.mxu0 %v124
    %600 = vmatpush.xpose.msra.mxu0 %v120
    %601 = vmatpush.xpose.msra.mxu0 %v116
    %602 = vmatpush.xpose.msra.mxu0 %v112
    %603 = vmatpush.xpose.msra.mxu0 %v108
    %604 = vmatmul.f32.gmra.mxu0 %v40
    %v605 = vpop.f32.mrf.mxu0
    %v606 = vadd.f32 %v586, %v605
    %607 = vdwg.mxu0
    %608 = vmatpush.xpose.msra.mxu0 %v169
    %609 = vmatpush.xpose.msra.mxu0 %v165
    %610 = vmatpush.xpose.msra.mxu0 %v161
    %611 = vmatpush.xpose.msra.mxu0 %v157
    %612 = vmatpush.xpose.msra.mxu0 %v153
    %613 = vmatpush.xpose.msra.mxu0 %v149
    %614 = vmatpush.xpose.msra.mxu0 %v145
    %615 = vmatpush.xpose.msra.mxu0 %v141
    %616 = vmatpush.xpose.msra.mxu0 %v137
    %617 = vmatpush.xpose.msra.mxu0 %v133
    %618 = vmatpush.xpose.msra.mxu0 %v129
    %619 = vmatpush.xpose.msra.mxu0 %v125
    %620 = vmatpush.xpose.msra.mxu0 %v121
    %621 = vmatpush.xpose.msra.mxu0 %v117
    %622 = vmatpush.xpose.msra.mxu0 %v113
    %623 = vmatpush.xpose.msra.mxu0 %v109
    %624 = vmatmul.f32.gmra.mxu0 %v41
    %v625 = vpop.f32.mrf.mxu0
    %v626 = vadd.f32 %v606, %v625
    %627 = vdwg.mxu0
    %628 = vmatpush.xpose.msra.mxu0 %v393
    %629 = vmatpush.xpose.msra.mxu0 %v390
    %630 = vmatpush.xpose.msra.mxu0 %v387
    %631 = vmatpush.xpose.msra.mxu0 %v384
    %632 = vmatpush.xpose.msra.mxu0 %v381
    %633 = vmatpush.xpose.msra.mxu0 %v378
    %634 = vmatpush.xpose.msra.mxu0 %v375
    %635 = vmatpush.xpose.msra.mxu0 %v372
    %636 = vmatpush.xpose.msra.mxu0 %v369
    %637 = vmatpush.xpose.msra.mxu0 %v366
    %638 = vmatpush.xpose.msra.mxu0 %v363
    %639 = vmatpush.xpose.msra.mxu0 %v360
    %640 = vmatpush.xpose.msra.mxu0 %v357
    %641 = vmatpush.xpose.msra.mxu0 %v354
    %642 = vmatpush.xpose.msra.mxu0 %v351
    %643 = vmatpush.xpose.msra.mxu0 %v348
    %644 = vmatmul.f32.gmra.mxu0 %v297
    %v645 = vpop.f32.mrf.mxu0
    %v646 = vadd.f32 %v626, %v645
    %647 = vdwg.mxu0
    %648 = vmatpush.xpose.msra.mxu0 %v231
    %649 = vmatpush.xpose.msra.mxu0 %v227
    %650 = vmatpush.xpose.msra.mxu0 %v223
    %651 = vmatpush.xpose.msra.mxu0 %v219
    %652 = vmatpush.xpose.msra.mxu0 %v215
    %653 = vmatpush.xpose.msra.mxu0 %v211
    %654 = vmatpush.xpose.msra.mxu0 %v207
    %655 = vmatpush.xpose.msra.mxu0 %v203
    %656 = vmatpush.xpose.msra.mxu0 %v199
    %657 = vmatpush.xpose.msra.mxu0 %v195
    %658 = vmatpush.xpose.msra.mxu0 %v191
    %659 = vmatpush.xpose.msra.mxu0 %v187
    %660 = vmatpush.xpose.msra.mxu0 %v183
    %661 = vmatpush.xpose.msra.mxu0 %v179
    %662 = vmatpush.xpose.msra.mxu0 %v175
    %663 = vmatpush.xpose.msra.mxu0 %v171
    %664 = vmatmul.f32.gmra.mxu0 %v39
    %v665 = vpop.f32.mrf.mxu0
    %v666 = vadd.f32 0.0, %v665
    %667 = vdwg.mxu0
    %668 = vmatpush.xpose.msra.mxu0 %v232
    %669 = vmatpush.xpose.msra.mxu0 %v228
    %670 = vmatpush.xpose.msra.mxu0 %v224
    %671 = vmatpush.xpose.msra.mxu0 %v220
    %672 = vmatpush.xpose.msra.mxu0 %v216
    %673 = vmatpush.xpose.msra.mxu0 %v212
    %674 = vmatpush.xpose.msra.mxu0 %v208
    %675 = vmatpush.xpose.msra.mxu0 %v204
    %676 = vmatpush.xpose.msra.mxu0 %v200
    %677 = vmatpush.xpose.msra.mxu0 %v196
    %678 = vmatpush.xpose.msra.mxu0 %v192
    %679 = vmatpush.xpose.msra.mxu0 %v188
    %680 = vmatpush.xpose.msra.mxu0 %v184
    %681 = vmatpush.xpose.msra.mxu0 %v180
    %682 = vmatpush.xpose.msra.mxu0 %v176
    %683 = vmatpush.xpose.msra.mxu0 %v172
    %684 = vmatmul.f32.gmra.mxu0 %v40
    %v685 = vpop.f32.mrf.mxu0
    %v686 = vadd.f32 %v666, %v685
    %687 = vdwg.mxu0
    %688 = vmatpush.xpose.msra.mxu0 %v233
    %689 = vmatpush.xpose.msra.mxu0 %v229
    %690 = vmatpush.xpose.msra.mxu0 %v225
    %691 = vmatpush.xpose.msra.mxu0 %v221
    %692 = vmatpush.xpose.msra.mxu0 %v217
    %693 = vmatpush.xpose.msra.mxu0 %v213
    %694 = vmatpush.xpose.msra.mxu0 %v209
    %695 = vmatpush.xpose.msra.mxu0 %v205
    %696 = vmatpush.xpose.msra.mxu0 %v201
    %697 = vmatpush.xpose.msra.mxu0 %v197
    %698 = vmatpush.xpose.msra.mxu0 %v193
    %699 = vmatpush.xpose.msra.mxu0 %v189
    %700 = vmatpush.xpose.msra.mxu0 %v185
    %701 = vmatpush.xpose.msra.mxu0 %v181
    %702 = vmatpush.xpose.msra.mxu0 %v177
    %703 = vmatpush.xpose.msra.mxu0 %v173
    %704 = vmatmul.f32.gmra.mxu0 %v41
    %v705 = vpop.f32.mrf.mxu0
    %v706 = vadd.f32 %v686, %v705
    %707 = vdwg.mxu0
    %708 = vmatpush.xpose.msra.mxu0 %v441
    %709 = vmatpush.xpose.msra.mxu0 %v438
    %710 = vmatpush.xpose.msra.mxu0 %v435
    %711 = vmatpush.xpose.msra.mxu0 %v432
    %712 = vmatpush.xpose.msra.mxu0 %v429
    %713 = vmatpush.xpose.msra.mxu0 %v426
    %714 = vmatpush.xpose.msra.mxu0 %v423
    %715 = vmatpush.xpose.msra.mxu0 %v420
    %716 = vmatpush.xpose.msra.mxu0 %v417
    %717 = vmatpush.xpose.msra.mxu0 %v414
    %718 = vmatpush.xpose.msra.mxu0 %v411
    %719 = vmatpush.xpose.msra.mxu0 %v408
    %720 = vmatpush.xpose.msra.mxu0 %v405
    %721 = vmatpush.xpose.msra.mxu0 %v402
    %722 = vmatpush.xpose.msra.mxu0 %v399
    %723 = vmatpush.xpose.msra.mxu0 %v396
    %724 = vmatmul.f32.gmra.mxu0 %v297
    %v725 = vpop.f32.mrf.mxu0
    %v726 = vadd.f32 %v706, %v725
    %727 = vdwg.mxu0
    %728 = vmatpush.xpose.msra.mxu0 0.0
    %729 = vmatpush.xpose.msra.mxu0 %v291
    %730 = vmatpush.xpose.msra.mxu0 %v287
    %731 = vmatpush.xpose.msra.mxu0 %v283
    %732 = vmatpush.xpose.msra.mxu0 %v279
    %733 = vmatpush.xpose.msra.mxu0 %v275
    %734 = vmatpush.xpose.msra.mxu0 %v271
    %735 = vmatpush.xpose.msra.mxu0 %v267
    %736 = vmatpush.xpose.msra.mxu0 %v263
    %737 = vmatpush.xpose.msra.mxu0 %v259
    %738 = vmatpush.xpose.msra.mxu0 %v255
    %739 = vmatpush.xpose.msra.mxu0 %v251
    %740 = vmatpush.xpose.msra.mxu0 %v247
    %741 = vmatpush.xpose.msra.mxu0 %v243
    %742 = vmatpush.xpose.msra.mxu0 %v239
    %743 = vmatpush.xpose.msra.mxu0 %v235
    %744 = vmatmul.f32.gmra.mxu0 %v39
    %v745 = vpop.f32.mrf.mxu0
    %v746 = vadd.f32 0.0, %v745
    %747 = vdwg.mxu0
    %748 = vmatpush.xpose.msra.mxu0 0.0
    %749 = vmatpush.xpose.msra.mxu0 %v292
    %750 = vmatpush.xpose.msra.mxu0 %v288
    %751 = vmatpush.xpose.msra.mxu0 %v284
    %752 = vmatpush.xpose.msra.mxu0 %v280
    %753 = vmatpush.xpose.msra.mxu0 %v276
    %754 = vmatpush.xpose.msra.mxu0 %v272
    %755 = vmatpush.xpose.msra.mxu0 %v268
    %756 = vmatpush.xpose.msra.mxu0 %v264
    %757 = vmatpush.xpose.msra.mxu0 %v260
    %758 = vmatpush.xpose.msra.mxu0 %v256
    %759 = vmatpush.xpose.msra.mxu0 %v252
    %760 = vmatpush.xpose.msra.mxu0 %v248
    %761 = vmatpush.xpose.msra.mxu0 %v244
    %762 = vmatpush.xpose.msra.mxu0 %v240
    %763 = vmatpush.xpose.msra.mxu0 %v236
    %764 = vmatmul.f32.gmra.mxu0 %v40
    %v765 = vpop.f32.mrf.mxu0
    %v766 = vadd.f32 %v746, %v765
    %767 = vdwg.mxu0
    %768 = vmatpush.xpose.msra.mxu0 0.0
    %769 = vmatpush.xpose.msra.mxu0 %v293
    %770 = vmatpush.xpose.msra.mxu0 %v289
    %771 = vmatpush.xpose.msra.mxu0 %v285
    %772 = vmatpush.xpose.msra.mxu0 %v281
    %773 = vmatpush.xpose.msra.mxu0 %v277
    %774 = vmatpush.xpose.msra.mxu0 %v273
    %775 = vmatpush.xpose.msra.mxu0 %v269
    %776 = vmatpush.xpose.msra.mxu0 %v265
    %777 = vmatpush.xpose.msra.mxu0 %v261
    %778 = vmatpush.xpose.msra.mxu0 %v257
    %779 = vmatpush.xpose.msra.mxu0 %v253
    %780 = vmatpush.xpose.msra.mxu0 %v249
    %781 = vmatpush.xpose.msra.mxu0 %v245
    %782 = vmatpush.xpose.msra.mxu0 %v241
    %783 = vmatpush.xpose.msra.mxu0 %v237
    %784 = vmatmul.f32.gmra.mxu0 %v41
    %v785 = vpop.f32.mrf.mxu0
    %v786 = vadd.f32 %v766, %v785
    %787 = vdwg.mxu0
    %788 = vmatpush.xpose.msra.mxu0 0.0
    %789 = vmatpush.xpose.msra.mxu0 %v486
    %790 = vmatpush.xpose.msra.mxu0 %v483
    %791 = vmatpush.xpose.msra.mxu0 %v480
    %792 = vmatpush.xpose.msra.mxu0 %v477
    %793 = vmatpush.xpose.msra.mxu0 %v474
    %794 = vmatpush.xpose.msra.mxu0 %v471
    %795 = vmatpush.xpose.msra.mxu0 %v468
    %796 = vmatpush.xpose.msra.mxu0 %v465
    %797 = vmatpush.xpose.msra.mxu0 %v462
    %798 = vmatpush.xpose.msra.mxu0 %v459
    %799 = vmatpush.xpose.msra.mxu0 %v456
    %800 = vmatpush.xpose.msra.mxu0 %v453
    %801 = vmatpush.xpose.msra.mxu0 %v450
    %802 = vmatpush.xpose.msra.mxu0 %v447
    %803 = vmatpush.xpose.msra.mxu0 %v444
    %804 = vmatmul.f32.gmra.mxu0 %v297
    %v805 = vpop.f32.mrf.mxu0
    %v806 = vadd.f32 %v786, %v805
    %807 = vdwg.mxu0
    %v808 = vld [vmem:[%s2] sm:$0xff]
    %v809 = vld [vmem:[%s2 + $0x8] sm:$0xff]
    %v810 = vld [vmem:[%s3] sm:$0xff]
    %v811 = vld [vmem:[%s3 + $0x8] sm:$0xff]
    %vm812 = vcmask 64512
    %v814 = vsel %vm812, %v810, 0
    %v817 = vsel %vm812, %v811, 0
    %819 = vmatpush.msra.mxu0 0.0
    %820 = vmatpush.msra.mxu0 0.0
    %821 = vmatpush.msra.mxu0 0.0
    %822 = vmatpush.msra.mxu0 0.0
    %823 = vmatpush.msra.mxu0 0.0
    %824 = vmatpush.msra.mxu0 0.0
    %825 = vmatpush.msra.mxu0 0.0
    %826 = vmatpush.msra.mxu0 0.0
    %827 = vmatpush.msra.mxu0 0.0
    %828 = vmatpush.msra.mxu0 0.0
    %829 = vmatpush.msra.mxu0 0.0
    %830 = vmatpush.msra.mxu0 0.0
    %831 = vmatpush.msra.mxu0 0.0
    %832 = vmatpush.msra.mxu0 0.0
    %833 = vmatpush.msra.mxu0 0.0
    %834 = vmatpush.msra.mxu0 %v39
    %835 = vmatmul.f32.gmra.mxu0 %v814
    %v836 = vpop.f32.mrf.mxu0
    %v837 = vadd.f32 0.0, %v836
    %838 = vmatmul.f32.gmra.mxu0 %v817
    %v839 = vpop.f32.mrf.mxu0
    %v840 = vadd.f32 0.0, %v839
    %841 = vdwg.mxu0
    %842 = vmatpush.msra.mxu0 0.0
    %843 = vmatpush.msra.mxu0 0.0
    %844 = vmatpush.msra.mxu0 0.0
    %845 = vmatpush.msra.mxu0 0.0
    %846 = vmatpush.msra.mxu0 0.0
    %847 = vmatpush.msra.mxu0 0.0
    %848 = vmatpush.msra.mxu0 0.0
    %849 = vmatpush.msra.mxu0 0.0
    %850 = vmatpush.msra.mxu0 0.0
    %851 = vmatpush.msra.mxu0 0.0
    %852 = vmatpush.msra.mxu0 0.0
    %853 = vmatpush.msra.mxu0 0.0
    %854 = vmatpush.msra.mxu0 0.0
    %855 = vmatpush.msra.mxu0 0.0
    %856 = vmatpush.msra.mxu0 0.0
    %857 = vmatpush.msra.mxu0 %v40
    %858 = vmatmul.f32.gmra.mxu0 %v814
    %v859 = vpop.f32.mrf.mxu0
    %v860 = vadd.f32 0.0, %v859
    %861 = vmatmul.f32.gmra.mxu0 %v817
    %v862 = vpop.f32.mrf.mxu0
    %v863 = vadd.f32 0.0, %v862
    %864 = vdwg.mxu0
    %865 = vmatpush.msra.mxu0 0.0
    %866 = vmatpush.msra.mxu0 0.0
    %867 = vmatpush.msra.mxu0 0.0
    %868 = vmatpush.msra.mxu0 0.0
    %869 = vmatpush.msra.mxu0 0.0
    %870 = vmatpush.msra.mxu0 0.0
    %871 = vmatpush.msra.mxu0 0.0
    %872 = vmatpush.msra.mxu0 0.0
    %873 = vmatpush.msra.mxu0 0.0
    %874 = vmatpush.msra.mxu0 0.0
    %875 = vmatpush.msra.mxu0 0.0
    %876 = vmatpush.msra.mxu0 0.0
    %877 = vmatpush.msra.mxu0 0.0
    %878 = vmatpush.msra.mxu0 0.0
    %879 = vmatpush.msra.mxu0 0.0
    %880 = vmatpush.msra.mxu0 %v41
    %881 = vmatmul.f32.gmra.mxu0 %v814
    %v882 = vpop.f32.mrf.mxu0
    %v883 = vadd.f32 0.0, %v882
    %884 = vmatmul.f32.gmra.mxu0 %v817
    %v885 = vpop.f32.mrf.mxu0
    %v886 = vadd.f32 0.0, %v885
    %887 = vdwg.mxu0
    %888 = vmatpush.msra.mxu0 0.0
    %889 = vmatpush.msra.mxu0 0.0
    %890 = vmatpush.msra.mxu0 0.0
    %891 = vmatpush.msra.mxu0 0.0
    %892 = vmatpush.msra.mxu0 0.0
    %893 = vmatpush.msra.mxu0 0.0
    %894 = vmatpush.msra.mxu0 0.0
    %895 = vmatpush.msra.mxu0 0.0
    %896 = vmatpush.msra.mxu0 0.0
    %897 = vmatpush.msra.mxu0 0.0
    %898 = vmatpush.msra.mxu0 0.0
    %899 = vmatpush.msra.mxu0 0.0
    %900 = vmatpush.msra.mxu0 0.0
    %901 = vmatpush.msra.mxu0 0.0
    %902 = vmatpush.msra.mxu0 0.0
    %903 = vmatpush.msra.mxu0 %v42
    %904 = vmatmul.f32.gmra.mxu0 %v814
    %v905 = vpop.f32.mrf.mxu0
    %v906 = vadd.f32 0.0, %v905
    %907 = vmatmul.f32.gmra.mxu0 %v817
    %v908 = vpop.f32.mrf.mxu0
    %v909 = vadd.f32 0.0, %v908
    %910 = vdwg.mxu0
    %v912 = vsel %vm812, %v808, 0
    %v915 = vsel %vm812, %v809, 0
    %917 = vmatpush.msra.mxu0 0.0
    %918 = vmatpush.msra.mxu0 0.0
    %919 = vmatpush.msra.mxu0 0.0
    %920 = vmatpush.msra.mxu0 0.0
    %921 = vmatpush.msra.mxu0 0.0
    %922 = vmatpush.msra.mxu0 0.0
    %923 = vmatpush.msra.mxu0 0.0
    %924 = vmatpush.msra.mxu0 0.0
    %925 = vmatpush.msra.mxu0 0.0
    %926 = vmatpush.msra.mxu0 0.0
    %927 = vmatpush.msra.mxu0 0.0
    %928 = vmatpush.msra.mxu0 0.0
    %929 = vmatpush.msra.mxu0 0.0
    %930 = vmatpush.msra.mxu0 0.0
    %931 = vmatpush.msra.mxu0 0.0
    %932 = vmatpush.msra.mxu0 %v566
    %933 = vmatmul.f32.gmra.mxu0 %v912
    %v934 = vpop.f32.mrf.mxu0
    %v935 = vadd.f32 %v837, %v934
    %936 = vmatmul.f32.gmra.mxu0 %v915
    %v937 = vpop.f32.mrf.mxu0
    %v938 = vadd.f32 %v840, %v937
    %939 = vdwg.mxu0
    %940 = vmatpush.msra.mxu0 0.0
    %941 = vmatpush.msra.mxu0 0.0
    %942 = vmatpush.msra.mxu0 0.0
    %943 = vmatpush.msra.mxu0 0.0
    %944 = vmatpush.msra.mxu0 0.0
    %945 = vmatpush.msra.mxu0 0.0
    %946 = vmatpush.msra.mxu0 0.0
    %947 = vmatpush.msra.mxu0 0.0
    %948 = vmatpush.msra.mxu0 0.0
    %949 = vmatpush.msra.mxu0 0.0
    %950 = vmatpush.msra.mxu0 0.0
    %951 = vmatpush.msra.mxu0 0.0
    %952 = vmatpush.msra.mxu0 0.0
    %953 = vmatpush.msra.mxu0 0.0
    %954 = vmatpush.msra.mxu0 0.0
    %955 = vmatpush.msra.mxu0 %v646
    %956 = vmatmul.f32.gmra.mxu0 %v912
    %v957 = vpop.f32.mrf.mxu0
    %v958 = vadd.f32 %v860, %v957
    %959 = vmatmul.f32.gmra.mxu0 %v915
    %v960 = vpop.f32.mrf.mxu0
    %v961 = vadd.f32 %v863, %v960
    %962 = vdwg.mxu0
    %963 = vmatpush.msra.mxu0 0.0
    %964 = vmatpush.msra.mxu0 0.0
    %965 = vmatpush.msra.mxu0 0.0
    %966 = vmatpush.msra.mxu0 0.0
    %967 = vmatpush.msra.mxu0 0.0
    %968 = vmatpush.msra.mxu0 0.0
    %969 = vmatpush.msra.mxu0 0.0
    %970 = vmatpush.msra.mxu0 0.0
    %971 = vmatpush.msra.mxu0 0.0
    %972 = vmatpush.msra.mxu0 0.0
    %973 = vmatpush.msra.mxu0 0.0
    %974 = vmatpush.msra.mxu0 0.0
    %975 = vmatpush.msra.mxu0 0.0
    %976 = vmatpush.msra.mxu0 0.0
    %977 = vmatpush.msra.mxu0 0.0
    %978 = vmatpush.msra.mxu0 %v726
    %979 = vmatmul.f32.gmra.mxu0 %v912
    %v980 = vpop.f32.mrf.mxu0
    %v981 = vadd.f32 %v883, %v980
    %982 = vmatmul.f32.gmra.mxu0 %v915
    %v983 = vpop.f32.mrf.mxu0
    %v984 = vadd.f32 %v886, %v983
    %985 = vdwg.mxu0
    %986 = vmatpush.msra.mxu0 0.0
    %987 = vmatpush.msra.mxu0 0.0
    %988 = vmatpush.msra.mxu0 0.0
    %989 = vmatpush.msra.mxu0 0.0
    %990 = vmatpush.msra.mxu0 0.0
    %991 = vmatpush.msra.mxu0 0.0
    %992 = vmatpush.msra.mxu0 0.0
    %993 = vmatpush.msra.mxu0 0.0
    %994 = vmatpush.msra.mxu0 0.0
    %995 = vmatpush.msra.mxu0 0.0
    %996 = vmatpush.msra.mxu0 0.0
    %997 = vmatpush.msra.mxu0 0.0
    %998 = vmatpush.msra.mxu0 0.0
    %999 = vmatpush.msra.mxu0 0.0
    %1000 = vmatpush.msra.mxu0 0.0
    %1001 = vmatpush.msra.mxu0 %v806
    %1002 = vmatmul.f32.gmra.mxu0 %v912
    %v1003 = vpop.f32.mrf.mxu0
    %v1004 = vadd.f32 %v906, %v1003
    %1005 = vmatmul.f32.gmra.mxu0 %v915
    %v1006 = vpop.f32.mrf.mxu0
    %v1007 = vadd.f32 %v909, %v1006
    %1008 = vdwg.mxu0
    %v1009 = vadd.f32 %v935, %v958
    %v1010 = vadd.f32 %v1009, %v981
    %v1011 = vsel %vm295, %v1004, 0.0
    %v1012 = vadd.f32 %v1010, %v1011
    %1013 = vadd.xlane.f32.xlu0 %v1012
    %v1014 = vpop.xlane.xlu0 %1013
    %v1015 = vadd.f32 %v938, %v961
    %v1016 = vadd.f32 %v1015, %v984
    %v1017 = vsel %vm295, %v1007, 0.0
    %v1018 = vadd.f32 %v1016, %v1017
    %1019 = vadd.xlane.f32.xlu0 %v1018
    %v1020 = vpop.xlane.xlu0 %1019
    %v1021 = vadd.f32 %v1014, %v1020
    %v1022 = vmul.f32 %v1021, 0.001
    %v1023 = vsub.f32 %v935, %v1022
    %v1024 = vsub.f32 %v958, %v1022
    %v1025 = vsub.f32 %v981, %v1022
    %v1026 = vsub.f32 %v1004, %v1022
    %v1027 = vsub.f32 %v938, %v1022
    %v1028 = vsub.f32 %v961, %v1022
    %v1029 = vsub.f32 %v984, %v1022
    %v1030 = vsub.f32 %v1007, %v1022
    %v1031 = vmul.f32 %v1023, %v1023
    %v1032 = vmul.f32 %v1024, %v1024
    %v1033 = vmul.f32 %v1025, %v1025
    %v1034 = vmul.f32 %v1026, %v1026
    %v1035 = vmul.f32 %v1027, %v1027
    %v1036 = vmul.f32 %v1028, %v1028
    %v1037 = vmul.f32 %v1029, %v1029
    %v1038 = vmul.f32 %v1030, %v1030
    %v1039 = vadd.f32 %v1031, %v1032
    %v1040 = vadd.f32 %v1039, %v1033
    %v1041 = vsel %vm295, %v1034, 0.0
    %v1042 = vadd.f32 %v1040, %v1041
    %1043 = vadd.xlane.f32.xlu0 %v1042
    %v1044 = vpop.xlane.xlu0 %1043
    %v1045 = vadd.f32 %v1035, %v1036
    %v1046 = vadd.f32 %v1045, %v1037
    %v1047 = vsel %vm295, %v1038, 0.0
    %v1048 = vadd.f32 %v1046, %v1047
    %1049 = vadd.xlane.f32.xlu0 %v1048
    %v1050 = vpop.xlane.xlu0 %1049
    %v1051 = vadd.f32 %v1044, %v1050
    %v1052 = vmul.f32 %v1051, 0.001
    %v1053 = vld [vmem:[%s4] sm:$0xff]
    %v1054 = vadd.f32 %v1052, 1e-05
    %v1055 = vrsqrt.pop %v1054
    %v1056 = vmul.f32 %v1055, %v1054
    %v1057 = vmul.f32 %v1056, %v1055
    %v1058 = vmul.f32 0.5, %v1057
    %v1059 = vsub.f32 1.5, %v1058
    %v1060 = vmul.f32 %v1055, %v1059
    %vm1061 = vweird.f32 %v1054
    %vm1062 = vweird.f32 %v1055
    %vm1063 = vmor %vm1061, %vm1062
    %v1064 = vsel %vm1063, %v1055, %v1060
    %v1065 = vmul.f32 %v1053, %v1064
    %1067 = vset.pattern.permute.xlu0 0
    %1068 = vperm.xlu0 %1067, %v1065
    %v1069 = vpop.permute.xlu0 %1068
    %v1071 = vmul.f32 %v1023, %v1069
    %v1072 = vmul.f32 %v1024, %v1069
    %v1073 = vmul.f32 %v1025, %v1069
    %v1074 = vmul.f32 %v1026, %v1069
    %v1075 = vmul.f32 %v1027, %v1069
    %v1076 = vmul.f32 %v1028, %v1069
    %v1077 = vmul.f32 %v1029, %v1069
    %v1078 = vmul.f32 %v1030, %v1069
    %v1079 = vld [vmem:[%s5] sm:$0xff]
    %1081 = vset.pattern.permute.xlu0 0
    %1082 = vperm.xlu0 %1081, %v1079
    %v1083 = vpop.permute.xlu0 %1082
    %v1085 = vadd.f32 %v1071, %v1083
    %v1086 = vadd.f32 %v1072, %v1083
    %v1087 = vadd.f32 %v1073, %v1083
    %v1088 = vadd.f32 %v1074, %v1083
    %v1089 = vadd.f32 %v1075, %v1083
    %v1090 = vadd.f32 %v1076, %v1083
    %v1091 = vadd.f32 %v1077, %v1083
    %v1092 = vadd.f32 %v1078, %v1083
    %v1093 = vmax.f32 %v1085, 0.0
    %v1094 = vmax.f32 %v1086, 0.0
    %v1095 = vmax.f32 %v1087, 0.0
    %v1096 = vmax.f32 %v1088, 0.0
    %v1097 = vmax.f32 %v1089, 0.0
    %v1098 = vmax.f32 %v1090, 0.0
    %v1099 = vmax.f32 %v1091, 0.0
    %v1100 = vmax.f32 %v1092, 0.0
    %1101 = vst [vmem:[%s6] sm:$0xff] %v1093
    %1102 = vst [vmem:[%s6 + $0x8] sm:$0xff] %v1094
    %1103 = vst [vmem:[%s6 + $0x10] sm:$0xff] %v1095
    %1104 = vst.msk [vmem:[%s6 + $0x18] sm:$0xff] %vm295, %v1096
    %1105 = vst [vmem:[%s6 + $0x20] sm:$0xff] %v1097
    %1106 = vst [vmem:[%s6 + $0x28] sm:$0xff] %v1098
    %1107 = vst [vmem:[%s6 + $0x30] sm:$0xff] %v1099
    %1108 = vst.msk [vmem:[%s6 + $0x38] sm:$0xff] %vm295, %v1100
    // Predicated region
    $region30: #{_largegcn_forward_impl.1} parent=1 // pred_check
      _
    $region31: #{_largegcn_forward_impl.1} parent=1 // pred_check_branch
      %1110 = sbr.rel (0) target = $region33
    $region32: #{_largegcn_forward_impl.1} parent=1 // pred_region
      _
    $region33: #{_largegcn_forward_impl.1} parent=1 // pred_fallthru
      _
    // Predicated region
    $region34: #{_largegcn_forward_impl.1} parent=1 // pred_check
      _
    $region35: #{_largegcn_forward_impl.1} parent=1 // pred_check_branch
      %1112 = sbr.rel (0) target = $region37
    $region36: #{_largegcn_forward_impl.1} parent=1 // pred_region
      _
    $region37: #{_largegcn_forward_impl.1} parent=1 // pred_fallthru
      _
    %1113 = vsyncpa [#allocation3], 1

</llo_original>
